<compile_context>
chip_gen: v7x
topology: tpu7x:2x2x1
jax: 0.10.0
libtpu: 0.0.40
codegen_flags: <defaults>
</compile_context>

<pallas_src>
import functools

import numpy as np
import jax
import jax.numpy as jnp
from jax import lax
from jax.experimental import pallas as pl
from jax.experimental.pallas import tpu as pltpu

EPS = 1e-5


# ----------------------------- kernel -------------------------------------- #

def _fused_kernel(x_ref, w_ref, fold_ref, bcast_ref, gamma_ref, beta_ref, o_ref,
                  *, n_imgs, hp, h, n_taps, inv_m, eps, use_relu):
    """Fused conv + train-mode BN + ReLU for all images in one invocation.

    x_ref:     [n_imgs*hp, Wp*Cin]  stacked padded input rows, lane = (w_pad, cin)
    w_ref:     [K, Wp*Cin, W*Cout]  banded per-row-tap weights (VMEM resident)
    fold_ref:  [W*Cout, Cout]       0/1 matrix: lane (w, cout) -> channel
    bcast_ref: [Cout, W*Cout]       0/1 matrix: channel -> lane (w, cout)
    gamma_ref, beta_ref: [1, Cout]
    o_ref:     [n_imgs*h, W*Cout]   lane-dense output rows
    """
    m_rows = n_imgs * hp - (n_taps - 1)

    # ---- conv: K accumulated banded row-tap matmuls on the stacked rows ----
    acc = jnp.dot(x_ref[0:m_rows, :], w_ref[0],
                  preferred_element_type=jnp.float32)
    for ky in range(1, n_taps):                      # K small & static -> unrolled
        acc = acc + jnp.dot(x_ref[ky:ky + m_rows, :], w_ref[ky],
                            preferred_element_type=jnp.float32)

    # Rows straddling an image boundary (K-1 per image, created by stacking) are
    # junk: exclude them from the statistics and never store them.
    row_in_img = lax.broadcasted_iota(jnp.int32, (m_rows, 1), 0) % hp
    valid = row_in_img < h

    # ---- batch statistics per output channel (all in VMEM / vregs) ----
    masked = jnp.where(valid, acc, 0.0)
    lane_sum = jnp.sum(masked, axis=0, keepdims=True)                  # [1, W*Cout]
    ch_mean = jnp.dot(lane_sum, fold_ref[...],
                      preferred_element_type=jnp.float32) * inv_m      # [1, Cout]
    mean_row = jnp.dot(ch_mean, bcast_ref[...],
                       preferred_element_type=jnp.float32)             # [1, W*Cout]

    centered = jnp.where(valid, acc - mean_row, 0.0)                   # stable var
    lane_ssq = jnp.sum(centered * centered, axis=0, keepdims=True)
    ch_var = jnp.dot(lane_ssq, fold_ref[...],
                     preferred_element_type=jnp.float32) * inv_m       # [1, Cout]

    # ---- fold BN into one per-lane scale/shift and apply (+ ReLU) ----
    scale_c = gamma_ref[...] * lax.rsqrt(ch_var + eps)                 # [1, Cout]
    shift_c = beta_ref[...] - ch_mean * scale_c
    scale_row = jnp.dot(scale_c, bcast_ref[...],
                        preferred_element_type=jnp.float32)            # [1, W*Cout]
    shift_row = jnp.dot(shift_c, bcast_ref[...],
                        preferred_element_type=jnp.float32)

    y = acc * scale_row + shift_row                                    # 1 FMA
    if use_relu:                                                       # static
        y = jnp.maximum(y, 0.0)

    for b in range(n_imgs):                          # drop junk boundary rows
        o_ref[b * h:(b + 1) * h, :] = y[b * hp:b * hp + h, :].astype(o_ref.dtype)


# ----------------------------- wrapper ------------------------------------- #

def _banded_weights(weight, W, pad):
    """[Cout,Cin,K,K] (OIHW) -> [K, (W+2p)*Cin, W*Cout] block-banded row-tap weights.

    band[ky, (w+kx)*Cin + ci, w*Cout + co] = weight[co, ci, ky, kx]
    (HIGHEST precision: the contraction only selects entries, so it is exact.)
    """
    Cout, Cin, K, _ = weight.shape
    Wp = W + 2 * pad
    sel = np.zeros((K, Wp, W), dtype=np.float32)      # static 0/1 constant
    for kx in range(K):
        for w in range(W):
            sel[kx, w + kx, w] = 1.0
    wb = jnp.einsum('kaw,oiyk->yaiwo', jnp.asarray(sel),
                    weight.astype(jnp.float32),
                    precision=lax.Precision.HIGHEST)
    return wb.reshape(K, Wp * Cin, W * Cout)


@functools.partial(jax.jit, static_argnames=("filter_size", "activation"))
def conv_batch_forward(x_nchw, weight, bias, gamma, beta, filter_size,
                       activation="relu"):
    """x_nchw: [N, Cin, H, W]; weight: [Cout, Cin, K, K] (PyTorch layouts)."""
    N, Cin, H, W = x_nchw.shape
    Cout, _, K, _ = weight.shape
    assert K == filter_size and K % 2 == 1, "stride-1 'same' conv, odd filter only"
    pad = K // 2
    Hp, Wp = H + 2 * pad, W + 2 * pad
    WCout = W * Cout
    WpCin = Wp * Cin

    # Conv bias is intentionally unused: a per-channel bias before train-mode BN
    # is exactly cancelled by the mean subtraction.
    del bias

    # --- glue: NCHW -> stacked padded rows; lane axis = (w_pad, cin) ---
    x_nhwc = jnp.transpose(x_nchw, (0, 2, 3, 1)).astype(jnp.float32)
    x_pad = jnp.pad(x_nhwc, ((0, 0), (pad, pad), (pad, pad), (0, 0)))
    x_rows = x_pad.reshape(N * Hp, WpCin)             # [N*Hp, Wp*Cin]

    w_band = _banded_weights(weight, W, pad)          # [K, WpCin, WCout]
    fold_np = np.tile(np.eye(Cout, dtype=np.float32), (W, 1))   # [WCout, Cout]
    fold = jnp.asarray(fold_np)
    bcast = jnp.asarray(np.ascontiguousarray(fold_np.T))        # [Cout, WCout]
    gamma_row = gamma.astype(jnp.float32).reshape(1, Cout)
    beta_row = beta.astype(jnp.float32).reshape(1, Cout)

    kernel = functools.partial(
        _fused_kernel, n_imgs=N, hp=Hp, h=H, n_taps=K,
        inv_m=1.0 / float(N * H * W), eps=EPS,
        use_relu=(activation == "relu"))

    out_rows = pl.pallas_call(
        kernel,
        grid=(1,),
        in_specs=[
            pl.BlockSpec((N * Hp, WpCin), lambda i: (0, 0)),
            pl.BlockSpec((K, WpCin, WCout), lambda i: (0, 0, 0)),
            pl.BlockSpec((WCout, Cout), lambda i: (0, 0)),
            pl.BlockSpec((Cout, WCout), lambda i: (0, 0)),
            pl.BlockSpec((1, Cout), lambda i: (0, 0)),
            pl.BlockSpec((1, Cout), lambda i: (0, 0)),
        ],
        out_specs=pl.BlockSpec((N * H, WCout), lambda i: (0, 0)),
        out_shape=jax.ShapeDtypeStruct((N * H, WCout), jnp.float32),
        compiler_params=pltpu.CompilerParams(
            dimension_semantics=("arbitrary",)),
    )(x_rows, w_band, fold, bcast, gamma_row, beta_row)

    out_nhwc = out_rows.reshape(N, H, W, Cout)
    return jnp.transpose(out_nhwc, (0, 3, 1, 2))      # back to NCHW


# ----------------------------- reference ----------------------------------- #

def reference_forward(x_nchw, weight, bias, gamma, beta, filter_size):
    pad = filter_size // 2
    y = lax.conv_general_dilated(
        x_nchw, weight, window_strides=(1, 1),
        padding=((pad, pad), (pad, pad)),
        dimension_numbers=("NCHW", "OIHW", "NCHW"),
        precision=lax.Precision.HIGHEST,
    ) + bias.reshape(1, -1, 1, 1)
    mean = jnp.mean(y, axis=(0, 2, 3), keepdims=True)
    var = jnp.mean((y - mean) ** 2, axis=(0, 2, 3), keepdims=True)
    yn = (y - mean) * lax.rsqrt(var + EPS)
    yn = yn * gamma.reshape(1, -1, 1, 1) + beta.reshape(1, -1, 1, 1)
    return jnp.maximum(yn, 0.0)


if __name__ == "__main__":
    # ConvBatch(in_channels=4, out_channels=8, filter_size=3)
    N, Cin, H, W = 2, 4, 16, 16
    Cout, K = 8, 3

    key = jax.random.PRNGKey(0)
    kx, kw, kb, kg, kbeta = jax.random.split(key, 5)
    x = jax.random.normal(kx, (N, Cin, H, W), dtype=jnp.float32)
    weight = jax.random.normal(kw, (Cout, Cin, K, K), dtype=jnp.float32) * 0.1
    bias = jax.random.normal(kb, (Cout,), dtype=jnp.float32) * 0.1
    gamma = 1.0 + 0.1 * jax.random.normal(kg, (Cout,), dtype=jnp.float32)
    beta = 0.1 * jax.random.normal(kbeta, (Cout,), dtype=jnp.float32)

    out = conv_batch_forward(x, weight, bias, gamma, beta,
                             filter_size=K, activation="relu")
    out = jax.block_until_ready(out)

    ref = reference_forward(x, weight, bias, gamma, beta, K)
    assert out.shape == (N, Cout, H, W)
    max_err = float(jnp.max(jnp.abs(out - ref)))
    assert jnp.allclose(out, ref, atol=1e-3, rtol=1e-3), \
        f"mismatch vs reference (max_err={max_err})"
    print("KERNEL_OK")
</pallas_src>

<mosaic_0001>
module attributes {stable_mosaic.version = 11 : i64} {
  func.func @_fused_kernel(%arg0: i32, %arg1: memref<36x72xf32, #tpu.memory_space<vmem>>, %arg2: memref<3x72x128xf32, #tpu.memory_space<vmem>>, %arg3: memref<128x8xf32, #tpu.memory_space<vmem>>, %arg4: memref<8x128xf32, #tpu.memory_space<vmem>>, %arg5: memref<1x8xf32, #tpu.memory_space<vmem>>, %arg6: memref<1x8xf32, #tpu.memory_space<vmem>>, %arg7: memref<32x128xf32, #tpu.memory_space<vmem>>) attributes {dimension_semantics = [#tpu.dimension_semantics<arbitrary>], iteration_bounds = array<i64: 1>, scalar_prefetch = 0 : i64, scratch_operands = 0 : i64, tpu.core_type = #tpu.core_type<tc>, window_params = [{pipeline_mode = #tpu.pipeline_mode<synchronous>, transform_indices = @transform_0, window_bounds = array<i64: 36, 72>}, {pipeline_mode = #tpu.pipeline_mode<synchronous>, transform_indices = @transform_1, window_bounds = array<i64: 3, 72, 128>}, {pipeline_mode = #tpu.pipeline_mode<synchronous>, transform_indices = @transform_2, window_bounds = array<i64: 128, 8>}, {pipeline_mode = #tpu.pipeline_mode<synchronous>, transform_indices = @transform_3, window_bounds = array<i64: 8, 128>}, {pipeline_mode = #tpu.pipeline_mode<synchronous>, transform_indices = @transform_4, window_bounds = array<i64: 1, 8>}, {pipeline_mode = #tpu.pipeline_mode<synchronous>, transform_indices = @transform_5, window_bounds = array<i64: 1, 8>}, {pipeline_mode = #tpu.pipeline_mode<synchronous>, transform_indices = @transform_6, window_bounds = array<i64: 32, 128>}]} {
    %c0 = arith.constant 0 : index
    %c0_0 = arith.constant 0 : index
    %0 = vector.load %arg1[%c0, %c0_0] : memref<36x72xf32, #tpu.memory_space<vmem>>, vector<34x72xf32>
    %c0_1 = arith.constant 0 : index
    %c0_2 = arith.constant 0 : index
    %c0_3 = arith.constant 0 : index
    %1 = vector.load %arg2[%c0_1, %c0_2, %c0_3] : memref<3x72x128xf32, #tpu.memory_space<vmem>>, vector<1x72x128xf32>
    %2 = vector.shape_cast %1 : vector<1x72x128xf32> to vector<72x128xf32>
    %cst = arith.constant dense<0.000000e+00> : vector<34x128xf32>
    %3 = tpu.matmul %0, %2, %cst {dimension_numbers = #tpu.dot_dimension_numbers<[1], [0], [0], [1], [0, 0, 1, 1], [], []>} : vector<34x72xf32>, vector<72x128xf32>, vector<34x128xf32> -> vector<34x128xf32>
    %c1 = arith.constant 1 : index
    %c0_4 = arith.constant 0 : index
    %4 = vector.load %arg1[%c1, %c0_4] : memref<36x72xf32, #tpu.memory_space<vmem>>, vector<34x72xf32>
    %c1_5 = arith.constant 1 : index
    %c0_6 = arith.constant 0 : index
    %c0_7 = arith.constant 0 : index
    %5 = vector.load %arg2[%c1_5, %c0_6, %c0_7] : memref<3x72x128xf32, #tpu.memory_space<vmem>>, vector<1x72x128xf32>
    %6 = vector.shape_cast %5 : vector<1x72x128xf32> to vector<72x128xf32>
    %cst_8 = arith.constant dense<0.000000e+00> : vector<34x128xf32>
    %7 = tpu.matmul %4, %6, %cst_8 {dimension_numbers = #tpu.dot_dimension_numbers<[1], [0], [0], [1], [0, 0, 1, 1], [], []>} : vector<34x72xf32>, vector<72x128xf32>, vector<34x128xf32> -> vector<34x128xf32>
    %8 = arith.addf %3, %7 : vector<34x128xf32>
    %c2 = arith.constant 2 : index
    %c0_9 = arith.constant 0 : index
    %9 = vector.load %arg1[%c2, %c0_9] : memref<36x72xf32, #tpu.memory_space<vmem>>, vector<34x72xf32>
    %c2_10 = arith.constant 2 : index
    %c0_11 = arith.constant 0 : index
    %c0_12 = arith.constant 0 : index
    %10 = vector.load %arg2[%c2_10, %c0_11, %c0_12] : memref<3x72x128xf32, #tpu.memory_space<vmem>>, vector<1x72x128xf32>
    %11 = vector.shape_cast %10 : vector<1x72x128xf32> to vector<72x128xf32>
    %cst_13 = arith.constant dense<0.000000e+00> : vector<34x128xf32>
    %12 = tpu.matmul %9, %11, %cst_13 {dimension_numbers = #tpu.dot_dimension_numbers<[1], [0], [0], [1], [0, 0, 1, 1], [], []>} : vector<34x72xf32>, vector<72x128xf32>, vector<34x128xf32> -> vector<34x128xf32>
    %13 = arith.addf %8, %12 : vector<34x128xf32>
    %14 = tpu.iota {dimensions = array<i32: 0>} : vector<34x1xi32>
    %c18_i32 = arith.constant 18 : i32
    %c0_i32 = arith.constant 0 : i32
    %15 = arith.cmpi eq, %c18_i32, %c0_i32 : i32
    %c1_i32 = arith.constant 1 : i32
    %16 = arith.select %15, %c1_i32, %c18_i32 : i32
    %17 = vector.broadcast %16 : i32 to vector<34x1xi32>
    %18 = arith.remsi %14, %17 : vector<34x1xi32>
    %c0_i32_14 = arith.constant 0 : i32
    %19 = vector.broadcast %c0_i32_14 : i32 to vector<34x1xi32>
    %20 = arith.cmpi ne, %18, %19 : vector<34x1xi32>
    %c0_i32_15 = arith.constant 0 : i32
    %21 = vector.broadcast %c0_i32_15 : i32 to vector<34x1xi32>
    %22 = arith.cmpi slt, %18, %21 : vector<34x1xi32>
    %c0_i32_16 = arith.constant 0 : i32
    %23 = arith.cmpi slt, %16, %c0_i32_16 : i32
    %24 = vector.broadcast %23 : i1 to vector<34x1xi1>
    %25 = vector.broadcast %24 : vector<34x1xi1> to vector<34x1xi1>
    %26 = arith.xori %22, %25 : vector<34x1xi1>
    %27 = arith.andi %26, %20 : vector<34x1xi1>
    %28 = vector.broadcast %16 : i32 to vector<34x1xi32>
    %29 = arith.addi %18, %28 : vector<34x1xi32>
    %30 = arith.select %27, %29, %18 : vector<34x1xi1>, vector<34x1xi32>
    %c16_i32 = arith.constant 16 : i32
    %31 = vector.broadcast %c16_i32 : i32 to vector<34x1xi32>
    %32 = arith.cmpi slt, %30, %31 : vector<34x1xi32>
    %cst_17 = arith.constant 0.000000e+00 : f32
    %33 = vector.shape_cast %32 : vector<34x1xi1> to vector<34x1xi1>
    %34 = vector.broadcast %33 : vector<34x1xi1> to vector<34x128xi1>
    %35 = vector.broadcast %cst_17 : f32 to vector<34x128xf32>
    %36 = arith.select %34, %13, %35 : vector<34x128xi1>, vector<34x128xf32>
    %cst_18 = arith.constant dense<0.000000e+00> : vector<128xf32>
    %37 = vector.multi_reduction <add>, %36, %cst_18 [0] : vector<34x128xf32> to vector<128xf32>
    %38 = vector.shape_cast %37 : vector<128xf32> to vector<1x128xf32>
    %c0_19 = arith.constant 0 : index
    %c0_20 = arith.constant 0 : index
    %39 = vector.load %arg3[%c0_19, %c0_20] : memref<128x8xf32, #tpu.memory_space<vmem>>, vector<128x8xf32>
    %cst_21 = arith.constant dense<0.000000e+00> : vector<1x8xf32>
    %40 = tpu.matmul %38, %39, %cst_21 {dimension_numbers = #tpu.dot_dimension_numbers<[1], [0], [0], [1], [0, 0, 1, 1], [], []>} : vector<1x128xf32>, vector<128x8xf32>, vector<1x8xf32> -> vector<1x8xf32>
    %cst_22 = arith.constant 0.001953125 : f32
    %41 = vector.broadcast %cst_22 : f32 to vector<1x8xf32>
    %42 = arith.mulf %40, %41 : vector<1x8xf32>
    %c0_23 = arith.constant 0 : index
    %c0_24 = arith.constant 0 : index
    %43 = vector.load %arg4[%c0_23, %c0_24] : memref<8x128xf32, #tpu.memory_space<vmem>>, vector<8x128xf32>
    %cst_25 = arith.constant dense<0.000000e+00> : vector<1x128xf32>
    %44 = tpu.matmul %42, %43, %cst_25 {dimension_numbers = #tpu.dot_dimension_numbers<[1], [0], [0], [1], [0, 0, 1, 1], [], []>} : vector<1x8xf32>, vector<8x128xf32>, vector<1x128xf32> -> vector<1x128xf32>
    %45 = vector.broadcast %44 : vector<1x128xf32> to vector<34x128xf32>
    %46 = arith.subf %13, %45 : vector<34x128xf32>
    %cst_26 = arith.constant 0.000000e+00 : f32
    %47 = vector.shape_cast %32 : vector<34x1xi1> to vector<34x1xi1>
    %48 = vector.broadcast %47 : vector<34x1xi1> to vector<34x128xi1>
    %49 = vector.broadcast %cst_26 : f32 to vector<34x128xf32>
    %50 = arith.select %48, %46, %49 : vector<34x128xi1>, vector<34x128xf32>
    %51 = arith.mulf %50, %50 : vector<34x128xf32>
    %cst_27 = arith.constant dense<0.000000e+00> : vector<128xf32>
    %52 = vector.multi_reduction <add>, %51, %cst_27 [0] : vector<34x128xf32> to vector<128xf32>
    %53 = vector.shape_cast %52 : vector<128xf32> to vector<1x128xf32>
    %c0_28 = arith.constant 0 : index
    %c0_29 = arith.constant 0 : index
    %54 = vector.load %arg3[%c0_28, %c0_29] : memref<128x8xf32, #tpu.memory_space<vmem>>, vector<128x8xf32>
    %cst_30 = arith.constant dense<0.000000e+00> : vector<1x8xf32>
    %55 = tpu.matmul %53, %54, %cst_30 {dimension_numbers = #tpu.dot_dimension_numbers<[1], [0], [0], [1], [0, 0, 1, 1], [], []>} : vector<1x128xf32>, vector<128x8xf32>, vector<1x8xf32> -> vector<1x8xf32>
    %cst_31 = arith.constant 0.001953125 : f32
    %56 = vector.broadcast %cst_31 : f32 to vector<1x8xf32>
    %57 = arith.mulf %55, %56 : vector<1x8xf32>
    %c0_32 = arith.constant 0 : index
    %c0_33 = arith.constant 0 : index
    %58 = vector.load %arg5[%c0_32, %c0_33] : memref<1x8xf32, #tpu.memory_space<vmem>>, vector<1x8xf32>
    %cst_34 = arith.constant 9.99999974E-6 : f32
    %59 = vector.broadcast %cst_34 : f32 to vector<1x8xf32>
    %60 = arith.addf %57, %59 : vector<1x8xf32>
    %61 = math.rsqrt %60 : vector<1x8xf32>
    %62 = arith.mulf %58, %61 : vector<1x8xf32>
    %c0_35 = arith.constant 0 : index
    %c0_36 = arith.constant 0 : index
    %63 = vector.load %arg6[%c0_35, %c0_36] : memref<1x8xf32, #tpu.memory_space<vmem>>, vector<1x8xf32>
    %64 = arith.mulf %42, %62 : vector<1x8xf32>
    %65 = arith.subf %63, %64 : vector<1x8xf32>
    %c0_37 = arith.constant 0 : index
    %c0_38 = arith.constant 0 : index
    %66 = vector.load %arg4[%c0_37, %c0_38] : memref<8x128xf32, #tpu.memory_space<vmem>>, vector<8x128xf32>
    %cst_39 = arith.constant dense<0.000000e+00> : vector<1x128xf32>
    %67 = tpu.matmul %62, %66, %cst_39 {dimension_numbers = #tpu.dot_dimension_numbers<[1], [0], [0], [1], [0, 0, 1, 1], [], []>} : vector<1x8xf32>, vector<8x128xf32>, vector<1x128xf32> -> vector<1x128xf32>
    %c0_40 = arith.constant 0 : index
    %c0_41 = arith.constant 0 : index
    %68 = vector.load %arg4[%c0_40, %c0_41] : memref<8x128xf32, #tpu.memory_space<vmem>>, vector<8x128xf32>
    %cst_42 = arith.constant dense<0.000000e+00> : vector<1x128xf32>
    %69 = tpu.matmul %65, %68, %cst_42 {dimension_numbers = #tpu.dot_dimension_numbers<[1], [0], [0], [1], [0, 0, 1, 1], [], []>} : vector<1x8xf32>, vector<8x128xf32>, vector<1x128xf32> -> vector<1x128xf32>
    %70 = vector.broadcast %67 : vector<1x128xf32> to vector<34x128xf32>
    %71 = arith.mulf %13, %70 : vector<34x128xf32>
    %72 = vector.broadcast %69 : vector<1x128xf32> to vector<34x128xf32>
    %73 = arith.addf %71, %72 : vector<34x128xf32>
    %cst_43 = arith.constant 0.000000e+00 : f32
    %74 = vector.broadcast %cst_43 : f32 to vector<34x128xf32>
    %75 = arith.maximumf %73, %74 : vector<34x128xf32>
    %76 = vector.extract_strided_slice %75 {offsets = [0, 0], sizes = [16, 128], strides = [1, 1]} : vector<34x128xf32> to vector<16x128xf32>
    %c0_44 = arith.constant 0 : index
    %c0_45 = arith.constant 0 : index
    %77 = vector.load %arg7[%c0_44, %c0_45] : memref<32x128xf32, #tpu.memory_space<vmem>>, vector<16x128xf32>
    tpu.vector_store %arg7[%c0_44, %c0_45], %76 {strides = array<i32>} : memref<32x128xf32, #tpu.memory_space<vmem>>, vector<16x128xf32>,
    %78 = vector.extract_strided_slice %75 {offsets = [18, 0], sizes = [16, 128], strides = [1, 1]} : vector<34x128xf32> to vector<16x128xf32>
    %c16 = arith.constant 16 : index
    %c0_46 = arith.constant 0 : index
    %79 = vector.load %arg7[%c16, %c0_46] : memref<32x128xf32, #tpu.memory_space<vmem>>, vector<16x128xf32>
    tpu.vector_store %arg7[%c16, %c0_46], %78 {strides = array<i32>} : memref<32x128xf32, #tpu.memory_space<vmem>>, vector<16x128xf32>,
    return
  }
  func.func @transform_0(%arg0: i32) -> (i32, i32) {
    %c0_i32 = arith.constant 0 : i32
    %c0_i32_0 = arith.constant 0 : i32
    %c0_i32_1 = arith.constant 0 : i32
    return %c0_i32, %c0_i32_0 : i32, i32
  }
  func.func @transform_1(%arg0: i32) -> (i32, i32, i32) {
    %c0_i32 = arith.constant 0 : i32
    %c0_i32_0 = arith.constant 0 : i32
    %c0_i32_1 = arith.constant 0 : i32
    %c0_i32_2 = arith.constant 0 : i32
    return %c0_i32, %c0_i32_0, %c0_i32_1 : i32, i32, i32
  }
  func.func @transform_2(%arg0: i32) -> (i32, i32) {
    %c0_i32 = arith.constant 0 : i32
    %c0_i32_0 = arith.constant 0 : i32
    %c0_i32_1 = arith.constant 0 : i32
    return %c0_i32, %c0_i32_0 : i32, i32
  }
  func.func @transform_3(%arg0: i32) -> (i32, i32) {
    %c0_i32 = arith.constant 0 : i32
    %c0_i32_0 = arith.constant 0 : i32
    %c0_i32_1 = arith.constant 0 : i32
    return %c0_i32, %c0_i32_0 : i32, i32
  }
  func.func @transform_4(%arg0: i32) -> (i32, i32) {
    %c0_i32 = arith.constant 0 : i32
    %c0_i32_0 = arith.constant 0 : i32
    %c0_i32_1 = arith.constant 0 : i32
    return %c0_i32, %c0_i32_0 : i32, i32
  }
  func.func @transform_5(%arg0: i32) -> (i32, i32) {
    %c0_i32 = arith.constant 0 : i32
    %c0_i32_0 = arith.constant 0 : i32
    %c0_i32_1 = arith.constant 0 : i32
    return %c0_i32, %c0_i32_0 : i32, i32
  }
  func.func @transform_6(%arg0: i32) -> (i32, i32) {
    %c0_i32 = arith.constant 0 : i32
    %c0_i32_0 = arith.constant 0 : i32
    %c0_i32_1 = arith.constant 0 : i32
    return %c0_i32, %c0_i32_0 : i32, i32
  }
}

</mosaic_0001>

<llo_original>
// kernel: conv_batch_forward.1
$region0: #{conv_batch_forward.1}
  #allocation0 [shape = 'u32[]', space=smem, size = 0x4, offset = 0x4, fixed_abs, tag = 'smem constant byte address 0x4 - core index']
  #allocation1 [shape = 'u32[144,128]{1,0:T(1,128)}', space=vmem, size = 0x12000, scoped, tag = 'internal scratch']
  %s0 = inlined_call_operand.vmem [shape: f32[36,72], index: 0, kind: input, shape index: {}]
  %s1 = inlined_call_operand.vmem [shape: f32[3,72,128], index: 1, kind: input, shape index: {}]
  %s2 = inlined_call_operand.vmem [shape: f32[128,8], index: 2, kind: input, shape index: {}]
  %s3 = inlined_call_operand.vmem [shape: f32[8,128], index: 3, kind: input, shape index: {}]
  %s4 = inlined_call_operand.vmem [shape: f32[1,8], index: 4, kind: input, shape index: {}]
  %s5 = inlined_call_operand.vmem [shape: f32[1,8], index: 5, kind: input, shape index: {}]
  %s6 = inlined_call_operand.vmem [shape: f32[32,128], index: 6, kind: output, shape index: {}]
  %s7 = sld [smem:[#allocation0]]
  $region34: #{conv_batch_forward.1} parent=0
    _
  %s9 = ssub.s32 1, %s7
  %s10 = scalar_select 0, %s9, %s7
  // Predicated region
  $region2: #{conv_batch_forward.1} parent=0 // pred_check
    _
  $region3: #{conv_batch_forward.1} parent=0 // pred_check_branch
    %12 = sbr.rel (0) target = $region5
  $region4: #{conv_batch_forward.1} parent=0 // pred_region
    _
  $region5: #{conv_batch_forward.1} parent=0 // pred_fallthru
    _
  // Predicated region
  $region6: #{conv_batch_forward.1} parent=0 // pred_check
    _
  $region7: #{conv_batch_forward.1} parent=0 // pred_check_branch
    %14 = sbr.rel (0) target = $region9
  $region8: #{conv_batch_forward.1} parent=0 // pred_region
    _
  $region9: #{conv_batch_forward.1} parent=0 // pred_fallthru
    _
  // Predicated region
  $region10: #{conv_batch_forward.1} parent=0 // pred_check
    _
  $region11: #{conv_batch_forward.1} parent=0 // pred_check_branch
    %16 = sbr.rel (0) target = $region13
  $region12: #{conv_batch_forward.1} parent=0 // pred_region
    _
  $region13: #{conv_batch_forward.1} parent=0 // pred_fallthru
    _
  // Predicated region
  $region14: #{conv_batch_forward.1} parent=0 // pred_check
    _
  $region15: #{conv_batch_forward.1} parent=0 // pred_check_branch
    %18 = sbr.rel (0) target = $region17
  $region16: #{conv_batch_forward.1} parent=0 // pred_region
    _
  $region17: #{conv_batch_forward.1} parent=0 // pred_fallthru
    _
  // Predicated region
  $region18: #{conv_batch_forward.1} parent=0 // pred_check
    _
  $region19: #{conv_batch_forward.1} parent=0 // pred_check_branch
    %20 = sbr.rel (0) target = $region21
  $region20: #{conv_batch_forward.1} parent=0 // pred_region
    _
  $region21: #{conv_batch_forward.1} parent=0 // pred_fallthru
    _
  // Predicated region
  $region22: #{conv_batch_forward.1} parent=0 // pred_check
    _
  $region23: #{conv_batch_forward.1} parent=0 // pred_check_branch
    %22 = sbr.rel (0) target = $region25
  $region24: #{conv_batch_forward.1} parent=0 // pred_region
    _
  $region25: #{conv_batch_forward.1} parent=0 // pred_fallthru
    _
  %v23 = vld [vmem:[%s0] sm:$0xff]
  %v24 = vld [vmem:[%s0 + $0x8] sm:$0xff]
  %v25 = vld [vmem:[%s0 + $0x10] sm:$0xff]
  %v26 = vld [vmem:[%s0 + $0x18] sm:$0xff]
  %v27 = vld [vmem:[%s0 + $0x20] sm:$0x3]
  %v28 = vld [vmem:[%s1] sm:$0xff]
  %v29 = vld [vmem:[%s1 + $0x8] sm:$0xff]
  %v30 = vld [vmem:[%s1 + $0x10] sm:$0xff]
  %v31 = vld [vmem:[%s1 + $0x18] sm:$0xff]
  %v32 = vld [vmem:[%s1 + $0x20] sm:$0xff]
  %v33 = vld [vmem:[%s1 + $0x28] sm:$0xff]
  %v34 = vld [vmem:[%s1 + $0x30] sm:$0xff]
  %v35 = vld [vmem:[%s1 + $0x38] sm:$0xff]
  %v36 = vld [vmem:[%s1 + $0x40] sm:$0xff]
  %v37 = vld [vmem:[%s0 + $0x1] sm:$0xff]
  %v38 = vld [vmem:[%s0 + $0x9] sm:$0xff]
  %v39 = vld [vmem:[%s0 + $0x11] sm:$0xff]
  %v40 = vld [vmem:[%s0 + $0x19] sm:$0xff]
  %v41 = vld [vmem:[%s0 + $0x21] sm:$0x3]
  %s42 = scalar_lea.vmem %s1, 72
  %v43 = vld [vmem:[%s42] sm:$0xff]
  %v44 = vld [vmem:[%s42 + $0x8] sm:$0xff]
  %v45 = vld [vmem:[%s42 + $0x10] sm:$0xff]
  %v46 = vld [vmem:[%s42 + $0x18] sm:$0xff]
  %v47 = vld [vmem:[%s42 + $0x20] sm:$0xff]
  %v48 = vld [vmem:[%s42 + $0x28] sm:$0xff]
  %v49 = vld [vmem:[%s42 + $0x30] sm:$0xff]
  %v50 = vld [vmem:[%s42 + $0x38] sm:$0xff]
  %v51 = vld [vmem:[%s42 + $0x40] sm:$0xff]
  %vm52 = vcmask 588800
  %v54 = vsel %vm52, %v37, 0
  %v57 = vsel %vm52, %v38, 0
  %v60 = vsel %vm52, %v39, 0
  %v63 = vsel %vm52, %v40, 0
  %v66 = vsel %vm52, %v41, 0
  %68 = vmatprep.subr.mxu0 0.0
  %69 = vmatpush1.msra.mxu0 %v43
  %70 = vmatprep.subr.mxu0 0.0
  %71 = vmatpush1.msra.mxu0 %v44
  %72 = vmatprep.subr.mxu0 0.0
  %73 = vmatpush1.msra.mxu0 %v45
  %74 = vmatprep.subr.mxu0 0.0
  %75 = vmatpush1.msra.mxu0 %v46
  %76 = vmatprep.subr.mxu0 0.0
  %77 = vmatpush1.msra.mxu0 %v47
  %78 = vmatprep.subr.mxu0 0.0
  %79 = vmatpush1.msra.mxu0 %v48
  %80 = vmatprep.subr.mxu0 0.0
  %81 = vmatpush1.msra.mxu0 %v49
  %82 = vmatprep.subr.mxu0 0.0
  %83 = vmatpush1.msra.mxu0 %v50
  %84 = vmatprep.subr.mxu0 0.0
  %85 = vmatpush1.msra.mxu0 %v51
  %86 = vmatprep.subr.mxu0 0.0
  %87 = vmatpush1.msra.mxu0 0.0
  %88 = vmatprep.subr.mxu0 0.0
  %89 = vmatpush1.msra.mxu0 0.0
  %90 = vmatprep.subr.mxu0 0.0
  %91 = vmatpush1.msra.mxu0 0.0
  %92 = vmatprep.subr.mxu0 0.0
  %93 = vmatpush1.msra.mxu0 0.0
  %94 = vmatprep.subr.mxu0 0.0
  %95 = vmatpush1.msra.mxu0 0.0
  %96 = vmatprep.subr.mxu0 0.0
  %97 = vmatpush1.msra.mxu0 0.0
  %98 = vmatprep.subr.mxu0 0.0
  %99 = vmatpush1.msra.mxu0 0.0
  %100 = vmatprep.subr.mxu0 0.0
  %101 = vmatpush1.msra.mxu0 0.0
  %102 = vmatprep.subr.mxu0 0.0
  %103 = vmatpush1.msra.mxu0 0.0
  %104 = vmatprep.subr.mxu0 0.0
  %105 = vmatpush1.msra.mxu0 0.0
  %106 = vmatprep.subr.mxu0 0.0
  %107 = vmatpush1.msra.mxu0 0.0
  %108 = vmatprep.subr.mxu0 0.0
  %109 = vmatpush1.msra.mxu0 0.0
  %110 = vmatprep.subr.mxu0 0.0
  %111 = vmatpush1.msra.mxu0 0.0
  %112 = vmatprep.subr.mxu0 0.0
  %113 = vmatpush1.msra.mxu0 0.0
  %114 = vmatprep.subr.mxu0 0.0
  %115 = vmatpush1.msra.mxu0 0.0
  %116 = vmatprep.subr.mxu0 0.0
  %117 = vmatpush1.msra.mxu0 0.0
  %118 = vmatprep.subr.mxu0 0.0
  %119 = vmatpush1.msra.mxu0 0.0
  %120 = vmatprep.subr.mxu0 0.0
  %121 = vmatpush1.msra.mxu0 0.0
  %122 = vmatprep.subr.mxu0 0.0
  %123 = vmatpush1.msra.mxu0 0.0
  %124 = vmatprep.subr.mxu0 0.0
  %125 = vmatpush1.msra.mxu0 0.0
  %126 = vmatprep.subr.mxu0 0.0
  %127 = vmatpush1.msra.mxu0 0.0
  %128 = vmatprep.subr.mxu0 0.0
  %129 = vmatpush1.msra.mxu0 0.0
  %130 = vmatprep.subr.mxu0 0.0
  %131 = vmatpush1.msra.mxu0 0.0
  %132 = vmatprep.mubr.f32.mxu0 0.0
  %133 = vmatmul.mubr.f32.gmra.mrb[0].mxu0 %v54
  %v134 = vpop.f32.mrb[0].mxu0
  %v135 = vadd.f32 0.0, %v134
  %v136 = vpop.f32.mrb[0].mxu0
  %137 = vmatprep.mubr.f32.mxu0 0.0
  %138 = vmatmul.mubr.f32.gmra.mrb[0].mxu0 %v57
  %v139 = vpop.f32.mrb[0].mxu0
  %v140 = vadd.f32 0.0, %v139
  %v141 = vpop.f32.mrb[0].mxu0
  %142 = vmatprep.mubr.f32.mxu0 0.0
  %143 = vmatmul.mubr.f32.gmra.mrb[0].mxu0 %v60
  %v144 = vpop.f32.mrb[0].mxu0
  %v145 = vadd.f32 0.0, %v144
  %v146 = vpop.f32.mrb[0].mxu0
  %147 = vmatprep.mubr.f32.mxu0 0.0
  %148 = vmatmul.mubr.f32.gmra.mrb[0].mxu0 %v63
  %v149 = vpop.f32.mrb[0].mxu0
  %v150 = vadd.f32 0.0, %v149
  %v151 = vpop.f32.mrb[0].mxu0
  %152 = vmatprep.mubr.f32.mxu0 0.0
  %153 = vmatmul.mubr.f32.gmra.mrb[0].mxu0 %v66
  %v154 = vpop.f32.mrb[0].mxu0
  %v155 = vadd.f32 0.0, %v154
  %v156 = vpop.f32.mrb[0].mxu0
  %157 = vdwg.mxu0
  %v159 = vsel %vm52, %v23, 0
  %v162 = vsel %vm52, %v24, 0
  %v165 = vsel %vm52, %v25, 0
  %v168 = vsel %vm52, %v26, 0
  %v171 = vsel %vm52, %v27, 0
  %173 = vmatprep.subr.mxu0 0.0
  %174 = vmatpush1.msra.mxu0 %v28
  %175 = vmatprep.subr.mxu0 0.0
  %176 = vmatpush1.msra.mxu0 %v29
  %177 = vmatprep.subr.mxu0 0.0
  %178 = vmatpush1.msra.mxu0 %v30
  %179 = vmatprep.subr.mxu0 0.0
  %180 = vmatpush1.msra.mxu0 %v31
  %181 = vmatprep.subr.mxu0 0.0
  %182 = vmatpush1.msra.mxu0 %v32
  %183 = vmatprep.subr.mxu0 0.0
  %184 = vmatpush1.msra.mxu0 %v33
  %185 = vmatprep.subr.mxu0 0.0
  %186 = vmatpush1.msra.mxu0 %v34
  %187 = vmatprep.subr.mxu0 0.0
  %188 = vmatpush1.msra.mxu0 %v35
  %189 = vmatprep.subr.mxu0 0.0
  %190 = vmatpush1.msra.mxu0 %v36
  %191 = vmatprep.subr.mxu0 0.0
  %192 = vmatpush1.msra.mxu0 0.0
  %193 = vmatprep.subr.mxu0 0.0
  %194 = vmatpush1.msra.mxu0 0.0
  %195 = vmatprep.subr.mxu0 0.0
  %196 = vmatpush1.msra.mxu0 0.0
  %197 = vmatprep.subr.mxu0 0.0
  %198 = vmatpush1.msra.mxu0 0.0
  %199 = vmatprep.subr.mxu0 0.0
  %200 = vmatpush1.msra.mxu0 0.0
  %201 = vmatprep.subr.mxu0 0.0
  %202 = vmatpush1.msra.mxu0 0.0
  %203 = vmatprep.subr.mxu0 0.0
  %204 = vmatpush1.msra.mxu0 0.0
  %205 = vmatprep.subr.mxu0 0.0
  %206 = vmatpush1.msra.mxu0 0.0
  %207 = vmatprep.subr.mxu0 0.0
  %208 = vmatpush1.msra.mxu0 0.0
  %209 = vmatprep.subr.mxu0 0.0
  %210 = vmatpush1.msra.mxu0 0.0
  %211 = vmatprep.subr.mxu0 0.0
  %212 = vmatpush1.msra.mxu0 0.0
  %213 = vmatprep.subr.mxu0 0.0
  %214 = vmatpush1.msra.mxu0 0.0
  %215 = vmatprep.subr.mxu0 0.0
  %216 = vmatpush1.msra.mxu0 0.0
  %217 = vmatprep.subr.mxu0 0.0
  %218 = vmatpush1.msra.mxu0 0.0
  %219 = vmatprep.subr.mxu0 0.0
  %220 = vmatpush1.msra.mxu0 0.0
  %221 = vmatprep.subr.mxu0 0.0
  %222 = vmatpush1.msra.mxu0 0.0
  %223 = vmatprep.subr.mxu0 0.0
  %224 = vmatpush1.msra.mxu0 0.0
  %225 = vmatprep.subr.mxu0 0.0
  %226 = vmatpush1.msra.mxu0 0.0
  %227 = vmatprep.subr.mxu0 0.0
  %228 = vmatpush1.msra.mxu0 0.0
  %229 = vmatprep.subr.mxu0 0.0
  %230 = vmatpush1.msra.mxu0 0.0
  %231 = vmatprep.subr.mxu0 0.0
  %232 = vmatpush1.msra.mxu0 0.0
  %233 = vmatprep.subr.mxu0 0.0
  %234 = vmatpush1.msra.mxu0 0.0
  %235 = vmatprep.subr.mxu0 0.0
  %236 = vmatpush1.msra.mxu0 0.0
  %237 = vmatprep.mubr.f32.mxu0 0.0
  %238 = vmatmul.mubr.f32.gmra.mrb[0].mxu0 %v159
  %v239 = vpop.f32.mrb[0].mxu0
  %v240 = vadd.f32 %v135, %v239
  %v241 = vpop.f32.mrb[0].mxu0
  %242 = vmatprep.mubr.f32.mxu0 0.0
  %243 = vmatmul.mubr.f32.gmra.mrb[0].mxu0 %v162
  %v244 = vpop.f32.mrb[0].mxu0
  %v245 = vadd.f32 %v140, %v244
  %v246 = vpop.f32.mrb[0].mxu0
  %247 = vmatprep.mubr.f32.mxu0 0.0
  %248 = vmatmul.mubr.f32.gmra.mrb[0].mxu0 %v165
  %v249 = vpop.f32.mrb[0].mxu0
  %v250 = vadd.f32 %v145, %v249
  %v251 = vpop.f32.mrb[0].mxu0
  %252 = vmatprep.mubr.f32.mxu0 0.0
  %253 = vmatmul.mubr.f32.gmra.mrb[0].mxu0 %v168
  %v254 = vpop.f32.mrb[0].mxu0
  %v255 = vadd.f32 %v150, %v254
  %v256 = vpop.f32.mrb[0].mxu0
  %257 = vmatprep.mubr.f32.mxu0 0.0
  %258 = vmatmul.mubr.f32.gmra.mrb[0].mxu0 %v171
  %v259 = vpop.f32.mrb[0].mxu0
  %v260 = vadd.f32 %v155, %v259
  %v261 = vpop.f32.mrb[0].mxu0
  %262 = vdwg.mxu0
  %v263 = vld [vmem:[%s0 + $0x2] sm:$0xff]
  %v264 = vld [vmem:[%s0 + $0xa] sm:$0xff]
  %v265 = vld [vmem:[%s0 + $0x12] sm:$0xff]
  %v266 = vld [vmem:[%s0 + $0x1a] sm:$0xff]
  %v267 = vld [vmem:[%s0 + $0x22] sm:$0x3]
  %s268 = scalar_lea.vmem %s1, 144
  %v269 = vld [vmem:[%s268] sm:$0xff]
  %v270 = vld [vmem:[%s268 + $0x8] sm:$0xff]
  %v271 = vld [vmem:[%s268 + $0x10] sm:$0xff]
  %v272 = vld [vmem:[%s268 + $0x18] sm:$0xff]
  %v273 = vld [vmem:[%s268 + $0x20] sm:$0xff]
  %v274 = vld [vmem:[%s268 + $0x28] sm:$0xff]
  %v275 = vld [vmem:[%s268 + $0x30] sm:$0xff]
  %v276 = vld [vmem:[%s268 + $0x38] sm:$0xff]
  %v277 = vld [vmem:[%s268 + $0x40] sm:$0xff]
  %v279 = vsel %vm52, %v263, 0
  %v282 = vsel %vm52, %v264, 0
  %v285 = vsel %vm52, %v265, 0
  %v288 = vsel %vm52, %v266, 0
  %v291 = vsel %vm52, %v267, 0
  %293 = vmatprep.subr.mxu0 0.0
  %294 = vmatpush1.msra.mxu0 %v269
  %295 = vmatprep.subr.mxu0 0.0
  %296 = vmatpush1.msra.mxu0 %v270
  %297 = vmatprep.subr.mxu0 0.0
  %298 = vmatpush1.msra.mxu0 %v271
  %299 = vmatprep.subr.mxu0 0.0
  %300 = vmatpush1.msra.mxu0 %v272
  %301 = vmatprep.subr.mxu0 0.0
  %302 = vmatpush1.msra.mxu0 %v273
  %303 = vmatprep.subr.mxu0 0.0
  %304 = vmatpush1.msra.mxu0 %v274
  %305 = vmatprep.subr.mxu0 0.0
  %306 = vmatpush1.msra.mxu0 %v275
  %307 = vmatprep.subr.mxu0 0.0
  %308 = vmatpush1.msra.mxu0 %v276
  %309 = vmatprep.subr.mxu0 0.0
  %310 = vmatpush1.msra.mxu0 %v277
  %311 = vmatprep.subr.mxu0 0.0
  %312 = vmatpush1.msra.mxu0 0.0
  %313 = vmatprep.subr.mxu0 0.0
  %314 = vmatpush1.msra.mxu0 0.0
  %315 = vmatprep.subr.mxu0 0.0
  %316 = vmatpush1.msra.mxu0 0.0
  %317 = vmatprep.subr.mxu0 0.0
  %318 = vmatpush1.msra.mxu0 0.0
  %319 = vmatprep.subr.mxu0 0.0
  %320 = vmatpush1.msra.mxu0 0.0
  %321 = vmatprep.subr.mxu0 0.0
  %322 = vmatpush1.msra.mxu0 0.0
  %323 = vmatprep.subr.mxu0 0.0
  %324 = vmatpush1.msra.mxu0 0.0
  %325 = vmatprep.subr.mxu0 0.0
  %326 = vmatpush1.msra.mxu0 0.0
  %327 = vmatprep.subr.mxu0 0.0
  %328 = vmatpush1.msra.mxu0 0.0
  %329 = vmatprep.subr.mxu0 0.0
  %330 = vmatpush1.msra.mxu0 0.0
  %331 = vmatprep.subr.mxu0 0.0
  %332 = vmatpush1.msra.mxu0 0.0
  %333 = vmatprep.subr.mxu0 0.0
  %334 = vmatpush1.msra.mxu0 0.0
  %335 = vmatprep.subr.mxu0 0.0
  %336 = vmatpush1.msra.mxu0 0.0
  %337 = vmatprep.subr.mxu0 0.0
  %338 = vmatpush1.msra.mxu0 0.0
  %339 = vmatprep.subr.mxu0 0.0
  %340 = vmatpush1.msra.mxu0 0.0
  %341 = vmatprep.subr.mxu0 0.0
  %342 = vmatpush1.msra.mxu0 0.0
  %343 = vmatprep.subr.mxu0 0.0
  %344 = vmatpush1.msra.mxu0 0.0
  %345 = vmatprep.subr.mxu0 0.0
  %346 = vmatpush1.msra.mxu0 0.0
  %347 = vmatprep.subr.mxu0 0.0
  %348 = vmatpush1.msra.mxu0 0.0
  %349 = vmatprep.subr.mxu0 0.0
  %350 = vmatpush1.msra.mxu0 0.0
  %351 = vmatprep.subr.mxu0 0.0
  %352 = vmatpush1.msra.mxu0 0.0
  %353 = vmatprep.subr.mxu0 0.0
  %354 = vmatpush1.msra.mxu0 0.0
  %355 = vmatprep.subr.mxu0 0.0
  %356 = vmatpush1.msra.mxu0 0.0
  %357 = vmatprep.mubr.f32.mxu0 0.0
  %358 = vmatmul.mubr.f32.gmra.mrb[0].mxu0 %v279
  %v359 = vpop.f32.mrb[0].mxu0
  %v360 = vadd.f32 0.0, %v359
  %v361 = vpop.f32.mrb[0].mxu0
  %362 = vmatprep.mubr.f32.mxu0 0.0
  %363 = vmatmul.mubr.f32.gmra.mrb[0].mxu0 %v282
  %v364 = vpop.f32.mrb[0].mxu0
  %v365 = vadd.f32 0.0, %v364
  %v366 = vpop.f32.mrb[0].mxu0
  %367 = vmatprep.mubr.f32.mxu0 0.0
  %368 = vmatmul.mubr.f32.gmra.mrb[0].mxu0 %v285
  %v369 = vpop.f32.mrb[0].mxu0
  %v370 = vadd.f32 0.0, %v369
  %v371 = vpop.f32.mrb[0].mxu0
  %372 = vmatprep.mubr.f32.mxu0 0.0
  %373 = vmatmul.mubr.f32.gmra.mrb[0].mxu0 %v288
  %v374 = vpop.f32.mrb[0].mxu0
  %v375 = vadd.f32 0.0, %v374
  %v376 = vpop.f32.mrb[0].mxu0
  %377 = vmatprep.mubr.f32.mxu0 0.0
  %378 = vmatmul.mubr.f32.gmra.mrb[0].mxu0 %v291
  %v379 = vpop.f32.mrb[0].mxu0
  %v380 = vadd.f32 0.0, %v379
  %v381 = vpop.f32.mrb[0].mxu0
  %382 = vdwg.mxu0
  %v383 = vadd.f32 %v240, %v360
  %v384 = vadd.f32 %v245, %v365
  %v385 = vadd.f32 %v250, %v370
  %v386 = vadd.f32 %v255, %v375
  %v387 = vadd.f32 %v260, %v380
  %v388 = vlaneseq
  %v389 = vshrl.u32 %v388, 7
  %v390 = vadd.s32 %v389, 8
  %v391 = vadd.s32 %v389, 16
  %v392 = vadd.s32 %v389, 24
  %v393 = vadd.s32 %v389, 32
  %vm394 = vcmp.lt.s32.totalorder %v389, 0
  %v395 = vsub.s32 0, %v389
  %v396 = vsel %vm394, %v395, %v389
  %v397 = vmul.u32.u64.compose %v396, 3817748708
  %v398 = vextract.low.u32 %v397
  %v399 = vextract.high.u32 %v397
  %v400 = vshrl.u32 %v399, 4
  %v401 = vmul.u32 %v400, 18
  %v402 = vsub.s32 %v396, %v401
  %v403 = vsub.s32 0, %v402
  %v404 = vsel %vm394, %v403, %v402
  %vm405 = vcmp.lt.s32.totalorder %v390, 0
  %v406 = vsub.s32 0, %v390
  %v407 = vsel %vm405, %v406, %v390
  %v408 = vmul.u32.u64.compose %v407, 3817748708
  %v409 = vextract.low.u32 %v408
  %v410 = vextract.high.u32 %v408
  %v411 = vshrl.u32 %v410, 4
  %v412 = vmul.u32 %v411, 18
  %v413 = vsub.s32 %v407, %v412
  %v414 = vsub.s32 0, %v413
  %v415 = vsel %vm405, %v414, %v413
  %vm416 = vcmp.lt.s32.totalorder %v391, 0
  %v417 = vsub.s32 0, %v391
  %v418 = vsel %vm416, %v417, %v391
  %v419 = vmul.u32.u64.compose %v418, 3817748708
  %v420 = vextract.low.u32 %v419
  %v421 = vextract.high.u32 %v419
  %v422 = vshrl.u32 %v421, 4
  %v423 = vmul.u32 %v422, 18
  %v424 = vsub.s32 %v418, %v423
  %v425 = vsub.s32 0, %v424
  %v426 = vsel %vm416, %v425, %v424
  %vm427 = vcmp.lt.s32.totalorder %v392, 0
  %v428 = vsub.s32 0, %v392
  %v429 = vsel %vm427, %v428, %v392
  %v430 = vmul.u32.u64.compose %v429, 3817748708
  %v431 = vextract.low.u32 %v430
  %v432 = vextract.high.u32 %v430
  %v433 = vshrl.u32 %v432, 4
  %v434 = vmul.u32 %v433, 18
  %v435 = vsub.s32 %v429, %v434
  %v436 = vsub.s32 0, %v435
  %v437 = vsel %vm427, %v436, %v435
  %vm438 = vcmp.lt.s32.totalorder %v393, 0
  %v439 = vsub.s32 0, %v393
  %v440 = vsel %vm438, %v439, %v393
  %v441 = vmul.u32.u64.compose %v440, 3817748708
  %v442 = vextract.low.u32 %v441
  %v443 = vextract.high.u32 %v441
  %v444 = vshrl.u32 %v443, 4
  %v445 = vmul.u32 %v444, 18
  %v446 = vsub.s32 %v440, %v445
  %v447 = vsub.s32 0, %v446
  %v448 = vsel %vm438, %v447, %v446
  %vm449 = vcmp.ne.s32.totalorder %v404, 0
  %vm450 = vcmp.ne.s32.totalorder %v415, 0
  %vm451 = vcmp.ne.s32.totalorder %v426, 0
  %vm452 = vcmp.ne.s32.totalorder %v437, 0
  %vm453 = vcmp.ne.s32.totalorder %v448, 0
  %vm454 = vcmp.lt.s32.totalorder %v404, 0
  %vm455 = vcmp.lt.s32.totalorder %v415, 0
  %vm456 = vcmp.lt.s32.totalorder %v426, 0
  %vm457 = vcmp.lt.s32.totalorder %v437, 0
  %vm458 = vcmp.lt.s32.totalorder %v448, 0
  %vm459 = vmand %vm454, %vm449
  %vm460 = vmand %vm455, %vm450
  %vm461 = vmand %vm456, %vm451
  %vm462 = vmand %vm457, %vm452
  %vm463 = vmand %vm458, %vm453
  %v464 = vadd.s32 %v404, 18
  %v465 = vadd.s32 %v415, 18
  %v466 = vadd.s32 %v426, 18
  %v467 = vadd.s32 %v437, 18
  %v468 = vadd.s32 %v448, 18
  %v469 = vsel %vm459, %v464, %v404
  %v470 = vsel %vm460, %v465, %v415
  %v471 = vsel %vm461, %v466, %v426
  %v472 = vsel %vm462, %v467, %v437
  %v473 = vsel %vm463, %v468, %v448
  %vm474 = vcmp.lt.s32.totalorder %v469, 16
  %vm475 = vcmp.lt.s32.totalorder %v470, 16
  %vm476 = vcmp.lt.s32.totalorder %v471, 16
  %vm477 = vcmp.lt.s32.totalorder %v472, 16
  %vm478 = vcmp.lt.s32.totalorder %v473, 16
  %v479 = vsel %vm474, 1, 0
  %v480 = vsel %vm475, 1, 0
  %v481 = vsel %vm476, 1, 0
  %v482 = vsel %vm477, 1, 0
  %v483 = vsel %vm478, 1, 0
  %vm484 = vcmp.eq.s32.totalorder %v479, 1
  %vm485 = vcmp.eq.s32.totalorder %v480, 1
  %vm486 = vcmp.eq.s32.totalorder %v481, 1
  %vm487 = vcmp.eq.s32.totalorder %v482, 1
  %vm488 = vcmp.eq.s32.totalorder %v483, 1
  %v489 = vsel %vm484, %v383, 0.0
  %v490 = vsel %vm485, %v384, 0.0
  %v491 = vsel %vm486, %v385, 0.0
  %v492 = vsel %vm487, %v386, 0.0
  %v493 = vsel %vm488, %v387, 0.0
  %v494 = vadd.f32 %v489, %v490
  %v495 = vadd.f32 %v494, %v491
  %v496 = vadd.f32 %v495, %v492
  %vm497 = vcmask 1041408
  %v498 = vsel %vm497, %v493, 0.0
  %v499 = vadd.f32 %v496, %v498
  %v500 = vrot.slane %v499, 4
  %v501 = vadd.f32 %v499, %v500
  %v502 = vrot.slane %v501, 2
  %v503 = vadd.f32 %v501, %v502
  %v504 = vrot.slane %v503, 1
  %v505 = vadd.f32 %v503, %v504
  %v506 = vld [vmem:[%s2] sm:$0xff]
  %v507 = vld [vmem:[%s2 + $0x8] sm:$0xff]
  %v508 = vld [vmem:[%s2 + $0x10] sm:$0xff]
  %v509 = vld [vmem:[%s2 + $0x18] sm:$0xff]
  %v510 = vld [vmem:[%s2 + $0x20] sm:$0xff]
  %v511 = vld [vmem:[%s2 + $0x28] sm:$0xff]
  %v512 = vld [vmem:[%s2 + $0x30] sm:$0xff]
  %v513 = vld [vmem:[%s2 + $0x38] sm:$0xff]
  %v514 = vld [vmem:[%s2 + $0x40] sm:$0xff]
  %v515 = vld [vmem:[%s2 + $0x48] sm:$0xff]
  %v516 = vld [vmem:[%s2 + $0x50] sm:$0xff]
  %v517 = vld [vmem:[%s2 + $0x58] sm:$0xff]
  %v518 = vld [vmem:[%s2 + $0x60] sm:$0xff]
  %v519 = vld [vmem:[%s2 + $0x68] sm:$0xff]
  %v520 = vld [vmem:[%s2 + $0x70] sm:$0xff]
  %v521 = vld [vmem:[%s2 + $0x78] sm:$0xff]
  %522 = vmatprep.subr.mxu0 0.0
  %523 = vmatpush1.msra.mxu0 %v506
  %524 = vmatprep.subr.mxu0 0.0
  %525 = vmatpush1.msra.mxu0 %v507
  %526 = vmatprep.subr.mxu0 0.0
  %527 = vmatpush1.msra.mxu0 %v508
  %528 = vmatprep.subr.mxu0 0.0
  %529 = vmatpush1.msra.mxu0 %v509
  %530 = vmatprep.subr.mxu0 0.0
  %531 = vmatpush1.msra.mxu0 %v510
  %532 = vmatprep.subr.mxu0 0.0
  %533 = vmatpush1.msra.mxu0 %v511
  %534 = vmatprep.subr.mxu0 0.0
  %535 = vmatpush1.msra.mxu0 %v512
  %536 = vmatprep.subr.mxu0 0.0
  %537 = vmatpush1.msra.mxu0 %v513
  %538 = vmatprep.subr.mxu0 0.0
  %539 = vmatpush1.msra.mxu0 %v514
  %540 = vmatprep.subr.mxu0 0.0
  %541 = vmatpush1.msra.mxu0 %v515
  %542 = vmatprep.subr.mxu0 0.0
  %543 = vmatpush1.msra.mxu0 %v516
  %544 = vmatprep.subr.mxu0 0.0
  %545 = vmatpush1.msra.mxu0 %v517
  %546 = vmatprep.subr.mxu0 0.0
  %547 = vmatpush1.msra.mxu0 %v518
  %548 = vmatprep.subr.mxu0 0.0
  %549 = vmatpush1.msra.mxu0 %v519
  %550 = vmatprep.subr.mxu0 0.0
  %551 = vmatpush1.msra.mxu0 %v520
  %552 = vmatprep.subr.mxu0 0.0
  %553 = vmatpush1.msra.mxu0 %v521
  %554 = vmatprep.subr.mxu0 0.0
  %555 = vmatpush1.msra.mxu0 0.0
  %556 = vmatprep.subr.mxu0 0.0
  %557 = vmatpush1.msra.mxu0 0.0
  %558 = vmatprep.subr.mxu0 0.0
  %559 = vmatpush1.msra.mxu0 0.0
  %560 = vmatprep.subr.mxu0 0.0
  %561 = vmatpush1.msra.mxu0 0.0
  %562 = vmatprep.subr.mxu0 0.0
  %563 = vmatpush1.msra.mxu0 0.0
  %564 = vmatprep.subr.mxu0 0.0
  %565 = vmatpush1.msra.mxu0 0.0
  %566 = vmatprep.subr.mxu0 0.0
  %567 = vmatpush1.msra.mxu0 0.0
  %568 = vmatprep.subr.mxu0 0.0
  %569 = vmatpush1.msra.mxu0 0.0
  %570 = vmatprep.subr.mxu0 0.0
  %571 = vmatpush1.msra.mxu0 0.0
  %572 = vmatprep.subr.mxu0 0.0
  %573 = vmatpush1.msra.mxu0 0.0
  %574 = vmatprep.subr.mxu0 0.0
  %575 = vmatpush1.msra.mxu0 0.0
  %576 = vmatprep.subr.mxu0 0.0
  %577 = vmatpush1.msra.mxu0 0.0
  %578 = vmatprep.subr.mxu0 0.0
  %579 = vmatpush1.msra.mxu0 0.0
  %580 = vmatprep.subr.mxu0 0.0
  %581 = vmatpush1.msra.mxu0 0.0
  %582 = vmatprep.subr.mxu0 0.0
  %583 = vmatpush1.msra.mxu0 0.0
  %584 = vmatprep.subr.mxu0 0.0
  %585 = vmatpush1.msra.mxu0 0.0
  %586 = vmatprep.mubr.f32.mxu0 0.0
  %587 = vmatmul.mubr.f32.gmra.mrb[0].mxu0 %v505
  %v588 = vpop.f32.mrb[0].mxu0
  %v589 = vadd.f32 0.0, %v588
  %v590 = vpop.f32.mrb[0].mxu0
  %591 = vdwg.mxu0
  %v592 = vmul.f32 %v589, 0.001953125
  %v593 = vld [vmem:[%s3] sm:$0xff]
  %vm594 = vcmask 64512
  %v596 = vsel %vm594, %v592, 0
  %598 = vmatprep.subr.mxu0 0.0
  %599 = vmatpush1.msra.mxu0 %v593
  %600 = vmatprep.subr.mxu0 0.0
  %601 = vmatpush1.msra.mxu0 0.0
  %602 = vmatprep.subr.mxu0 0.0
  %603 = vmatpush1.msra.mxu0 0.0
  %604 = vmatprep.subr.mxu0 0.0
  %605 = vmatpush1.msra.mxu0 0.0
  %606 = vmatprep.subr.mxu0 0.0
  %607 = vmatpush1.msra.mxu0 0.0
  %608 = vmatprep.subr.mxu0 0.0
  %609 = vmatpush1.msra.mxu0 0.0
  %610 = vmatprep.subr.mxu0 0.0
  %611 = vmatpush1.msra.mxu0 0.0
  %612 = vmatprep.subr.mxu0 0.0
  %613 = vmatpush1.msra.mxu0 0.0
  %614 = vmatprep.subr.mxu0 0.0
  %615 = vmatpush1.msra.mxu0 0.0
  %616 = vmatprep.subr.mxu0 0.0
  %617 = vmatpush1.msra.mxu0 0.0
  %618 = vmatprep.subr.mxu0 0.0
  %619 = vmatpush1.msra.mxu0 0.0
  %620 = vmatprep.subr.mxu0 0.0
  %621 = vmatpush1.msra.mxu0 0.0
  %622 = vmatprep.subr.mxu0 0.0
  %623 = vmatpush1.msra.mxu0 0.0
  %624 = vmatprep.subr.mxu0 0.0
  %625 = vmatpush1.msra.mxu0 0.0
  %626 = vmatprep.subr.mxu0 0.0
  %627 = vmatpush1.msra.mxu0 0.0
  %628 = vmatprep.subr.mxu0 0.0
  %629 = vmatpush1.msra.mxu0 0.0
  %630 = vmatprep.subr.mxu0 0.0
  %631 = vmatpush1.msra.mxu0 0.0
  %632 = vmatprep.subr.mxu0 0.0
  %633 = vmatpush1.msra.mxu0 0.0
  %634 = vmatprep.subr.mxu0 0.0
  %635 = vmatpush1.msra.mxu0 0.0
  %636 = vmatprep.subr.mxu0 0.0
  %637 = vmatpush1.msra.mxu0 0.0
  %638 = vmatprep.subr.mxu0 0.0
  %639 = vmatpush1.msra.mxu0 0.0
  %640 = vmatprep.subr.mxu0 0.0
  %641 = vmatpush1.msra.mxu0 0.0
  %642 = vmatprep.subr.mxu0 0.0
  %643 = vmatpush1.msra.mxu0 0.0
  %644 = vmatprep.subr.mxu0 0.0
  %645 = vmatpush1.msra.mxu0 0.0
  %646 = vmatprep.subr.mxu0 0.0
  %647 = vmatpush1.msra.mxu0 0.0
  %648 = vmatprep.subr.mxu0 0.0
  %649 = vmatpush1.msra.mxu0 0.0
  %650 = vmatprep.subr.mxu0 0.0
  %651 = vmatpush1.msra.mxu0 0.0
  %652 = vmatprep.subr.mxu0 0.0
  %653 = vmatpush1.msra.mxu0 0.0
  %654 = vmatprep.subr.mxu0 0.0
  %655 = vmatpush1.msra.mxu0 0.0
  %656 = vmatprep.subr.mxu0 0.0
  %657 = vmatpush1.msra.mxu0 0.0
  %658 = vmatprep.subr.mxu0 0.0
  %659 = vmatpush1.msra.mxu0 0.0
  %660 = vmatprep.subr.mxu0 0.0
  %661 = vmatpush1.msra.mxu0 0.0
  %662 = vmatprep.mubr.f32.mxu0 0.0
  %663 = vmatmul.mubr.f32.gmra.mrb[0].mxu0 %v596
  %v664 = vpop.f32.mrb[0].mxu0
  %v665 = vadd.f32 0.0, %v664
  %v666 = vpop.f32.mrb[0].mxu0
  %667 = vdwg.mxu0
  %v668 = vlaneseq
  %v669 = vshrl.u32 %v668, 7
  %v670 = vsub.s32 0, %v669
  %v671 = vrot.slane %v665, %v670
  %v672 = vsub.f32 %v383, %v671
  %v673 = vsub.f32 %v384, %v671
  %v674 = vsub.f32 %v385, %v671
  %v675 = vsub.f32 %v386, %v671
  %v676 = vsub.f32 %v387, %v671
  %v677 = vsel %vm484, %v672, 0.0
  %v678 = vsel %vm485, %v673, 0.0
  %v679 = vsel %vm486, %v674, 0.0
  %v680 = vsel %vm487, %v675, 0.0
  %v681 = vsel %vm488, %v676, 0.0
  %v682 = vmul.f32 %v677, %v677
  %v683 = vmul.f32 %v678, %v678
  %v684 = vmul.f32 %v679, %v679
  %v685 = vmul.f32 %v680, %v680
  %v686 = vmul.f32 %v681, %v681
  %v687 = vadd.f32 %v682, %v683
  %v688 = vadd.f32 %v687, %v684
  %v689 = vadd.f32 %v688, %v685
  %v690 = vsel %vm497, %v686, 0.0
  %v691 = vadd.f32 %v689, %v690
  %v692 = vrot.slane %v691, 4
  %v693 = vadd.f32 %v691, %v692
  %v694 = vrot.slane %v693, 2
  %v695 = vadd.f32 %v693, %v694
  %v696 = vrot.slane %v695, 1
  %v697 = vadd.f32 %v695, %v696
  %698 = vmatprep.subr.mxu0 0.0
  %699 = vmatpush1.msra.mxu0 %v506
  %700 = vmatprep.subr.mxu0 0.0
  %701 = vmatpush1.msra.mxu0 %v507
  %702 = vmatprep.subr.mxu0 0.0
  %703 = vmatpush1.msra.mxu0 %v508
  %704 = vmatprep.subr.mxu0 0.0
  %705 = vmatpush1.msra.mxu0 %v509
  %706 = vmatprep.subr.mxu0 0.0
  %707 = vmatpush1.msra.mxu0 %v510
  %708 = vmatprep.subr.mxu0 0.0
  %709 = vmatpush1.msra.mxu0 %v511
  %710 = vmatprep.subr.mxu0 0.0
  %711 = vmatpush1.msra.mxu0 %v512
  %712 = vmatprep.subr.mxu0 0.0
  %713 = vmatpush1.msra.mxu0 %v513
  %714 = vmatprep.subr.mxu0 0.0
  %715 = vmatpush1.msra.mxu0 %v514
  %716 = vmatprep.subr.mxu0 0.0
  %717 = vmatpush1.msra.mxu0 %v515
  %718 = vmatprep.subr.mxu0 0.0
  %719 = vmatpush1.msra.mxu0 %v516
  %720 = vmatprep.subr.mxu0 0.0
  %721 = vmatpush1.msra.mxu0 %v517
  %722 = vmatprep.subr.mxu0 0.0
  %723 = vmatpush1.msra.mxu0 %v518
  %724 = vmatprep.subr.mxu0 0.0
  %725 = vmatpush1.msra.mxu0 %v519
  %726 = vmatprep.subr.mxu0 0.0
  %727 = vmatpush1.msra.mxu0 %v520
  %728 = vmatprep.subr.mxu0 0.0
  %729 = vmatpush1.msra.mxu0 %v521
  %730 = vmatprep.subr.mxu0 0.0
  %731 = vmatpush1.msra.mxu0 0.0
  %732 = vmatprep.subr.mxu0 0.0
  %733 = vmatpush1.msra.mxu0 0.0
  %734 = vmatprep.subr.mxu0 0.0
  %735 = vmatpush1.msra.mxu0 0.0
  %736 = vmatprep.subr.mxu0 0.0
  %737 = vmatpush1.msra.mxu0 0.0
  %738 = vmatprep.subr.mxu0 0.0
  %739 = vmatpush1.msra.mxu0 0.0
  %740 = vmatprep.subr.mxu0 0.0
  %741 = vmatpush1.msra.mxu0 0.0
  %742 = vmatprep.subr.mxu0 0.0
  %743 = vmatpush1.msra.mxu0 0.0
  %744 = vmatprep.subr.mxu0 0.0
  %745 = vmatpush1.msra.mxu0 0.0
  %746 = vmatprep.subr.mxu0 0.0
  %747 = vmatpush1.msra.mxu0 0.0
  %748 = vmatprep.subr.mxu0 0.0
  %749 = vmatpush1.msra.mxu0 0.0
  %750 = vmatprep.subr.mxu0 0.0
  %751 = vmatpush1.msra.mxu0 0.0
  %752 = vmatprep.subr.mxu0 0.0
  %753 = vmatpush1.msra.mxu0 0.0
  %754 = vmatprep.subr.mxu0 0.0
  %755 = vmatpush1.msra.mxu0 0.0
  %756 = vmatprep.subr.mxu0 0.0
  %757 = vmatpush1.msra.mxu0 0.0
  %758 = vmatprep.subr.mxu0 0.0
  %759 = vmatpush1.msra.mxu0 0.0
  %760 = vmatprep.subr.mxu0 0.0
  %761 = vmatpush1.msra.mxu0 0.0
  %762 = vmatprep.mubr.f32.mxu0 0.0
  %763 = vmatmul.mubr.f32.gmra.mrb[0].mxu0 %v697
  %v764 = vpop.f32.mrb[0].mxu0
  %v765 = vadd.f32 0.0, %v764
  %v766 = vpop.f32.mrb[0].mxu0
  %767 = vdwg.mxu0
  %v768 = vmul.f32 %v765, 0.001953125
  %v769 = vld [vmem:[%s4] sm:$0x1]
  %v770 = vadd.f32 %v768, 1e-05
  %v771 = vrsqrt.pop %v770
  %v772 = vmul.f32 %v769, %v771
  %v773 = vld [vmem:[%s5] sm:$0x1]
  %v774 = vmul.f32 %v592, %v772
  %v775 = vsub.f32 %v773, %v774
  %v777 = vsel %vm594, %v772, 0
  %779 = vmatprep.subr.mxu0 0.0
  %780 = vmatpush1.msra.mxu0 %v593
  %781 = vmatprep.subr.mxu0 0.0
  %782 = vmatpush1.msra.mxu0 0.0
  %783 = vmatprep.subr.mxu0 0.0
  %784 = vmatpush1.msra.mxu0 0.0
  %785 = vmatprep.subr.mxu0 0.0
  %786 = vmatpush1.msra.mxu0 0.0
  %787 = vmatprep.subr.mxu0 0.0
  %788 = vmatpush1.msra.mxu0 0.0
  %789 = vmatprep.subr.mxu0 0.0
  %790 = vmatpush1.msra.mxu0 0.0
  %791 = vmatprep.subr.mxu0 0.0
  %792 = vmatpush1.msra.mxu0 0.0
  %793 = vmatprep.subr.mxu0 0.0
  %794 = vmatpush1.msra.mxu0 0.0
  %795 = vmatprep.subr.mxu0 0.0
  %796 = vmatpush1.msra.mxu0 0.0
  %797 = vmatprep.subr.mxu0 0.0
  %798 = vmatpush1.msra.mxu0 0.0
  %799 = vmatprep.subr.mxu0 0.0
  %800 = vmatpush1.msra.mxu0 0.0
  %801 = vmatprep.subr.mxu0 0.0
  %802 = vmatpush1.msra.mxu0 0.0
  %803 = vmatprep.subr.mxu0 0.0
  %804 = vmatpush1.msra.mxu0 0.0
  %805 = vmatprep.subr.mxu0 0.0
  %806 = vmatpush1.msra.mxu0 0.0
  %807 = vmatprep.subr.mxu0 0.0
  %808 = vmatpush1.msra.mxu0 0.0
  %809 = vmatprep.subr.mxu0 0.0
  %810 = vmatpush1.msra.mxu0 0.0
  %811 = vmatprep.subr.mxu0 0.0
  %812 = vmatpush1.msra.mxu0 0.0
  %813 = vmatprep.subr.mxu0 0.0
  %814 = vmatpush1.msra.mxu0 0.0
  %815 = vmatprep.subr.mxu0 0.0
  %816 = vmatpush1.msra.mxu0 0.0
  %817 = vmatprep.subr.mxu0 0.0
  %818 = vmatpush1.msra.mxu0 0.0
  %819 = vmatprep.subr.mxu0 0.0
  %820 = vmatpush1.msra.mxu0 0.0
  %821 = vmatprep.subr.mxu0 0.0
  %822 = vmatpush1.msra.mxu0 0.0
  %823 = vmatprep.subr.mxu0 0.0
  %824 = vmatpush1.msra.mxu0 0.0
  %825 = vmatprep.subr.mxu0 0.0
  %826 = vmatpush1.msra.mxu0 0.0
  %827 = vmatprep.subr.mxu0 0.0
  %828 = vmatpush1.msra.mxu0 0.0
  %829 = vmatprep.subr.mxu0 0.0
  %830 = vmatpush1.msra.mxu0 0.0
  %831 = vmatprep.subr.mxu0 0.0
  %832 = vmatpush1.msra.mxu0 0.0
  %833 = vmatprep.subr.mxu0 0.0
  %834 = vmatpush1.msra.mxu0 0.0
  %835 = vmatprep.subr.mxu0 0.0
  %836 = vmatpush1.msra.mxu0 0.0
  %837 = vmatprep.subr.mxu0 0.0
  %838 = vmatpush1.msra.mxu0 0.0
  %839 = vmatprep.subr.mxu0 0.0
  %840 = vmatpush1.msra.mxu0 0.0
  %841 = vmatprep.subr.mxu0 0.0
  %842 = vmatpush1.msra.mxu0 0.0
  %843 = vmatprep.mubr.f32.mxu0 0.0
  %844 = vmatmul.mubr.f32.gmra.mrb[0].mxu0 %v777
  %v845 = vpop.f32.mrb[0].mxu0
  %v846 = vadd.f32 0.0, %v845
  %v847 = vpop.f32.mrb[0].mxu0
  %848 = vdwg.mxu0
  %v850 = vsel %vm594, %v775, 0
  %852 = vmatprep.subr.mxu0 0.0
  %853 = vmatpush1.msra.mxu0 %v593
  %854 = vmatprep.subr.mxu0 0.0
  %855 = vmatpush1.msra.mxu0 0.0
  %856 = vmatprep.subr.mxu0 0.0
  %857 = vmatpush1.msra.mxu0 0.0
  %858 = vmatprep.subr.mxu0 0.0
  %859 = vmatpush1.msra.mxu0 0.0
  %860 = vmatprep.subr.mxu0 0.0
  %861 = vmatpush1.msra.mxu0 0.0
  %862 = vmatprep.subr.mxu0 0.0
  %863 = vmatpush1.msra.mxu0 0.0
  %864 = vmatprep.subr.mxu0 0.0
  %865 = vmatpush1.msra.mxu0 0.0
  %866 = vmatprep.subr.mxu0 0.0
  %867 = vmatpush1.msra.mxu0 0.0
  %868 = vmatprep.subr.mxu0 0.0
  %869 = vmatpush1.msra.mxu0 0.0
  %870 = vmatprep.subr.mxu0 0.0
  %871 = vmatpush1.msra.mxu0 0.0
  %872 = vmatprep.subr.mxu0 0.0
  %873 = vmatpush1.msra.mxu0 0.0
  %874 = vmatprep.subr.mxu0 0.0
  %875 = vmatpush1.msra.mxu0 0.0
  %876 = vmatprep.subr.mxu0 0.0
  %877 = vmatpush1.msra.mxu0 0.0
  %878 = vmatprep.subr.mxu0 0.0
  %879 = vmatpush1.msra.mxu0 0.0
  %880 = vmatprep.subr.mxu0 0.0
  %881 = vmatpush1.msra.mxu0 0.0
  %882 = vmatprep.subr.mxu0 0.0
  %883 = vmatpush1.msra.mxu0 0.0
  %884 = vmatprep.subr.mxu0 0.0
  %885 = vmatpush1.msra.mxu0 0.0
  %886 = vmatprep.subr.mxu0 0.0
  %887 = vmatpush1.msra.mxu0 0.0
  %888 = vmatprep.subr.mxu0 0.0
  %889 = vmatpush1.msra.mxu0 0.0
  %890 = vmatprep.subr.mxu0 0.0
  %891 = vmatpush1.msra.mxu0 0.0
  %892 = vmatprep.subr.mxu0 0.0
  %893 = vmatpush1.msra.mxu0 0.0
  %894 = vmatprep.subr.mxu0 0.0
  %895 = vmatpush1.msra.mxu0 0.0
  %896 = vmatprep.subr.mxu0 0.0
  %897 = vmatpush1.msra.mxu0 0.0
  %898 = vmatprep.subr.mxu0 0.0
  %899 = vmatpush1.msra.mxu0 0.0
  %900 = vmatprep.subr.mxu0 0.0
  %901 = vmatpush1.msra.mxu0 0.0
  %902 = vmatprep.subr.mxu0 0.0
  %903 = vmatpush1.msra.mxu0 0.0
  %904 = vmatprep.subr.mxu0 0.0
  %905 = vmatpush1.msra.mxu0 0.0
  %906 = vmatprep.subr.mxu0 0.0
  %907 = vmatpush1.msra.mxu0 0.0
  %908 = vmatprep.subr.mxu0 0.0
  %909 = vmatpush1.msra.mxu0 0.0
  %910 = vmatprep.subr.mxu0 0.0
  %911 = vmatpush1.msra.mxu0 0.0
  %912 = vmatprep.subr.mxu0 0.0
  %913 = vmatpush1.msra.mxu0 0.0
  %914 = vmatprep.subr.mxu0 0.0
  %915 = vmatpush1.msra.mxu0 0.0
  %916 = vmatprep.mubr.f32.mxu0 0.0
  %917 = vmatmul.mubr.f32.gmra.mrb[0].mxu0 %v850
  %v918 = vpop.f32.mrb[0].mxu0
  %v919 = vadd.f32 0.0, %v918
  %v920 = vpop.f32.mrb[0].mxu0
  %921 = vdwg.mxu0
  %v922 = vlaneseq
  %v923 = vshrl.u32 %v922, 7
  %v924 = vsub.s32 0, %v923
  %v925 = vrot.slane %v846, %v924
  %v926 = vmul.f32 %v383, %v925
  %v927 = vmul.f32 %v384, %v925
  %v928 = vmul.f32 %v385, %v925
  %v929 = vmul.f32 %v386, %v925
  %v930 = vmul.f32 %v387, %v925
  %v931 = vlaneseq
  %v932 = vshrl.u32 %v931, 7
  %v933 = vsub.s32 0, %v932
  %v934 = vrot.slane %v919, %v933
  %v935 = vadd.f32 %v926, %v934
  %v936 = vadd.f32 %v927, %v934
  %v937 = vadd.f32 %v928, %v934
  %v938 = vadd.f32 %v929, %v934
  %v939 = vadd.f32 %v930, %v934
  %v940 = vmax.f32 %v935, 0.0
  %v941 = vmax.f32 %v936, 0.0
  %v942 = vmax.f32 %v937, 0.0
  %v943 = vmax.f32 %v938, 0.0
  %v944 = vmax.f32 %v939, 0.0
  %945 = vst [vmem:[%s6] sm:$0xff] %v940
  %946 = vst [vmem:[%s6 + $0x8] sm:$0xff] %v941
  %947 = vst [vmem:[%s6 + $0xe] sm:$0xfc] %v942
  %948 = vst [vmem:[%s6 + $0x16] sm:$0xff] %v943
  %949 = vst [vmem:[%s6 + $0x1e] sm:$0x3] %v944
  // Predicated region
  $region26: #{conv_batch_forward.1} parent=0 // pred_check
    _
  $region27: #{conv_batch_forward.1} parent=0 // pred_check_branch
    %951 = sbr.rel (0) target = $region29
  $region28: #{conv_batch_forward.1} parent=0 // pred_region
    _
  $region29: #{conv_batch_forward.1} parent=0 // pred_fallthru
    _
  // Predicated region
  $region30: #{conv_batch_forward.1} parent=0 // pred_check
    _
  $region31: #{conv_batch_forward.1} parent=0 // pred_check_branch
    %953 = sbr.rel (0) target = $region33
  $region32: #{conv_batch_forward.1} parent=0 // pred_region
    _
  $region33: #{conv_batch_forward.1} parent=0 // pred_fallthru
    _

</llo_original>
